<compile_context>
chip_gen: v7x
topology: tpu7x:2x2x1
jax: 0.10.0
libtpu: 0.0.40
codegen_flags: <defaults>
</compile_context>

<pallas_src>
import functools
import math

import jax
import jax.numpy as jnp
from jax import lax
from jax.experimental import pallas as pl
from jax.experimental.pallas import tpu as pltpu

# Large finite negative: exp(masked - row_max) underflows to exactly 0, and a
# padded/fully-masked row can never produce NaN the way -inf would.
_MASK_VALUE = -0.7 * float(jnp.finfo(jnp.float32).max)


def _mha_kernel(xq_ref, xkv_ref, wq_ref, bq_ref, wkv_ref, bkv_ref,
                wp_ref, bp_ref, o_ref, *, n_head):
    """One grid step = one (batch, query-tile) pair; all heads, full key range.

    xq_ref  : (1, tq, C)  query rows of this tile             (compute dtype)
    xkv_ref : (1, T,  C)  full sequence rows for K/V          (compute dtype)
    wq_ref  : (C, C)      query projection weight             (compute dtype)
    bq_ref  : (1, C)      query projection bias               (f32)
    wkv_ref : (C, 2C)     concatenated K,V projection weight  (compute dtype)
    bkv_ref : (1, 2C)     concatenated K,V projection bias    (f32)
    wp_ref  : (C, C)      output projection weight            (compute dtype)
    bp_ref  : (1, C)      output projection bias              (f32)
    o_ref   : (1, tq, C)  output rows of this tile            (f32)
    """
    q_tile = xq_ref.shape[1]
    T = xkv_ref.shape[1]
    C = xkv_ref.shape[2]
    head_dim = C // n_head
    cdt = xq_ref.dtype                      # bf16 on the fast path
    scale = 1.0 / math.sqrt(head_dim)

    x_q = xq_ref[0]                         # (tq, C)
    x_kv = xkv_ref[0]                       # (T, C)

    # ---- wide projections (no N=head_dim matmuls), f32 accumulation ----
    q_all = jnp.dot(x_q, wq_ref[...], preferred_element_type=jnp.float32)
    q_all = (q_all + bq_ref[...]) * scale                       # (tq, C) f32
    kv = jnp.dot(x_kv, wkv_ref[...], preferred_element_type=jnp.float32)
    kv = kv + bkv_ref[...]                                      # (T, 2C) f32
    k_all = kv[:, :C]
    v_all = kv[:, C:]

    # ---- causal mask for this query tile (shared across heads) ----
    q_start = pl.program_id(1) * q_tile
    rows = q_start + lax.broadcasted_iota(jnp.int32, (q_tile, T), 0)
    cols = lax.broadcasted_iota(jnp.int32, (q_tile, T), 1)
    causal = cols <= rows

    # ---- per-head attention (head_dim-wide matmuls are inherent here; the
    # projections above already run at full MXU width) ----
    y_heads = []
    for h in range(n_head):
        sl = slice(h * head_dim, (h + 1) * head_dim)
        q_h = q_all[:, sl].astype(cdt)                          # (tq, hd)
        k_h = k_all[:, sl].astype(cdt)                          # (T,  hd)
        v_h = v_all[:, sl].astype(cdt)                          # (T,  hd)

        # scores: contract over head_dim, no materialized transpose
        s = lax.dot_general(q_h, k_h, (((1,), (1,)), ((), ())),
                            preferred_element_type=jnp.float32)  # (tq, T)
        s = jnp.where(causal, s, _MASK_VALUE)

        # softmax over keys, f32, exact normalization
        s = s - jnp.max(s, axis=-1, keepdims=True)
        p = jnp.exp(s)
        p = p * (1.0 / jnp.sum(p, axis=-1, keepdims=True))

        y_heads.append(jnp.dot(p.astype(cdt), v_h,
                               preferred_element_type=jnp.float32))  # (tq, hd)

    # ---- output projection: single wide (tq,C)@(C,C) matmul over all heads ----
    y = jnp.concatenate(y_heads, axis=-1).astype(cdt)           # (tq, C)
    out = jnp.dot(y, wp_ref[...], preferred_element_type=jnp.float32)
    o_ref[0] = (out + bp_ref[...]).astype(o_ref.dtype)


def multi_head_attention(x, w_qkv, b_qkv, w_proj, b_proj, *, n_head,
                         q_tile=None, compute_dtype=jnp.bfloat16):
    """x: (B, T, C) f32 -> (B, T, C) f32.

    w_qkv: (C, 3C) stored (in, out);  b_qkv: (3C,);  w_proj: (C, C);  b_proj: (C,).
    Matmuls run in `compute_dtype` (bf16 by default) with f32 accumulation.
    """
    B, T, C = x.shape
    assert C % n_head == 0
    assert w_qkv.shape == (C, 3 * C) and w_proj.shape == (C, C)

    # Query-tile size: full T for short sequences, otherwise 256-row tiles.
    if q_tile is None:
        q_tile = T if T <= 512 else 256
    if T % q_tile != 0 or (q_tile != T and q_tile % 8 != 0):
        q_tile = T
    num_q = T // q_tile

    cdt = compute_dtype
    x_c = x.astype(cdt)
    w_q = w_qkv[:, :C].astype(cdt)                   # (C, C)
    w_kv = w_qkv[:, C:].astype(cdt)                  # (C, 2C)  (K and V together)
    b_q = b_qkv.reshape(1, 3 * C)[:, :C].astype(jnp.float32)
    b_kv = b_qkv.reshape(1, 3 * C)[:, C:].astype(jnp.float32)
    w_p = w_proj.astype(cdt)
    b_p = b_proj.reshape(1, C).astype(jnp.float32)

    kernel = functools.partial(_mha_kernel, n_head=n_head)

    return pl.pallas_call(
        kernel,
        out_shape=jax.ShapeDtypeStruct((B, T, C), x.dtype),
        grid_spec=pltpu.PrefetchScalarGridSpec(
            num_scalar_prefetch=0,
            grid=(B, num_q),
            in_specs=[
                # activations: query rows of this tile + full rows for K/V
                pl.BlockSpec((1, q_tile, C), lambda b, qi: (b, qi, 0)),
                pl.BlockSpec((1, T, C),      lambda b, qi: (b, 0, 0)),
                # weights/biases: constant index_maps -> DMA'd once, resident
                pl.BlockSpec((C, C),         lambda b, qi: (0, 0)),
                pl.BlockSpec((1, C),         lambda b, qi: (0, 0)),
                pl.BlockSpec((C, 2 * C),     lambda b, qi: (0, 0)),
                pl.BlockSpec((1, 2 * C),     lambda b, qi: (0, 0)),
                pl.BlockSpec((C, C),         lambda b, qi: (0, 0)),
                pl.BlockSpec((1, C),         lambda b, qi: (0, 0)),
            ],
            out_specs=pl.BlockSpec((1, q_tile, C), lambda b, qi: (b, qi, 0)),
        ),
        compiler_params=pltpu.CompilerParams(
            dimension_semantics=("parallel", "parallel"),
            vmem_limit_bytes=48 * 1024 * 1024),
    )(x_c, x_c, w_q, b_q, w_kv, b_kv, w_p, b_p)


def reference_mha(x, w_qkv, b_qkv, w_proj, b_proj, *, n_head):
    """Pure-JAX f32 reference mirroring the PyTorch forward (dropout=identity)."""
    B, T, C = x.shape
    hd = C // n_head
    qkv = x @ w_qkv + b_qkv.reshape(1, 3 * C)                 # (B, T, 3C)
    q, k, v = jnp.split(qkv, 3, axis=-1)
    q = q.reshape(B, T, n_head, hd).transpose(0, 2, 1, 3)     # (B, H, T, hd)
    k = k.reshape(B, T, n_head, hd).transpose(0, 2, 1, 3)
    v = v.reshape(B, T, n_head, hd).transpose(0, 2, 1, 3)
    att = (q @ jnp.swapaxes(k, -2, -1)) / math.sqrt(hd)        # (B, H, T, T)
    mask = jnp.tril(jnp.ones((T, T), dtype=bool))
    att = jnp.where(mask[None, None], att, -jnp.inf)
    att = jax.nn.softmax(att, axis=-1)
    y = att @ v                                                # (B, H, T, hd)
    y = y.transpose(0, 2, 1, 3).reshape(B, T, C)
    return y @ w_proj + b_proj.reshape(1, C)


if __name__ == "__main__":
    # config: n_embd=32, n_head=4, block_size >= T, bias=True, dropout=0.0
    B, T, C, n_head = 2, 8, 32, 4

    key = jax.random.PRNGKey(0)
    kx, k1, k2, k3, k4 = jax.random.split(key, 5)

    # nn.Linear-like init: uniform(-1/sqrt(fan_in), 1/sqrt(fan_in)), (in, out).
    bound = 1.0 / math.sqrt(C)
    x = jax.random.normal(kx, (B, T, C), dtype=jnp.float32)
    w_qkv = jax.random.uniform(k1, (C, 3 * C), jnp.float32, -bound, bound)
    b_qkv = jax.random.uniform(k2, (3 * C,), jnp.float32, -bound, bound)
    w_proj = jax.random.uniform(k3, (C, C), jnp.float32, -bound, bound)
    b_proj = jax.random.uniform(k4, (C,), jnp.float32, -bound, bound)

    out = multi_head_attention(x, w_qkv, b_qkv, w_proj, b_proj, n_head=n_head)
    out = jax.block_until_ready(out)

    ref = reference_mha(x, w_qkv, b_qkv, w_proj, b_proj, n_head=n_head)
    assert out.shape == (B, T, C)
    assert bool(jnp.all(jnp.isfinite(out)))
    # bf16 inputs with f32 accumulation vs. an all-f32 reference: expected
    # elementwise error is O(bf16 eps) ~ 4e-3; 3e-2 leaves margin while any
    # real layout / masking / projection bug would show up as O(1) error.
    assert jnp.allclose(out, ref, atol=3e-2, rtol=3e-2), "mismatch vs reference"

    print("KERNEL_OK")
</pallas_src>

<mosaic_0001>
module attributes {stable_mosaic.version = 11 : i64} {
  func.func @_mha_kernel(%arg0: i32, %arg1: i32, %arg2: memref<1x8x32xbf16, #tpu.memory_space<vmem>>, %arg3: memref<1x8x32xbf16, #tpu.memory_space<vmem>>, %arg4: memref<32x32xbf16, #tpu.memory_space<vmem>>, %arg5: memref<1x32xf32, #tpu.memory_space<vmem>>, %arg6: memref<32x64xbf16, #tpu.memory_space<vmem>>, %arg7: memref<1x64xf32, #tpu.memory_space<vmem>>, %arg8: memref<32x32xbf16, #tpu.memory_space<vmem>>, %arg9: memref<1x32xf32, #tpu.memory_space<vmem>>, %arg10: memref<1x8x32xf32, #tpu.memory_space<vmem>>) attributes {dimension_semantics = [#tpu.dimension_semantics<parallel>, #tpu.dimension_semantics<parallel>], iteration_bounds = array<i64: 2, 1>, scalar_prefetch = 0 : i64, scratch_operands = 0 : i64, tpu.core_type = #tpu.core_type<tc>, window_params = [{transform_indices = @transform_0, window_bounds = array<i64: 1, 8, 32>}, {transform_indices = @transform_1, window_bounds = array<i64: 1, 8, 32>}, {pipeline_mode = #tpu.pipeline_mode<synchronous>, transform_indices = @transform_2, window_bounds = array<i64: 32, 32>}, {pipeline_mode = #tpu.pipeline_mode<synchronous>, transform_indices = @transform_3, window_bounds = array<i64: 1, 32>}, {pipeline_mode = #tpu.pipeline_mode<synchronous>, transform_indices = @transform_4, window_bounds = array<i64: 32, 64>}, {pipeline_mode = #tpu.pipeline_mode<synchronous>, transform_indices = @transform_5, window_bounds = array<i64: 1, 64>}, {pipeline_mode = #tpu.pipeline_mode<synchronous>, transform_indices = @transform_6, window_bounds = array<i64: 32, 32>}, {pipeline_mode = #tpu.pipeline_mode<synchronous>, transform_indices = @transform_7, window_bounds = array<i64: 1, 32>}, {transform_indices = @transform_8, window_bounds = array<i64: 1, 8, 32>}]} {
    %c0 = arith.constant 0 : index
    %c0_0 = arith.constant 0 : index
    %c0_1 = arith.constant 0 : index
    %0 = vector.load %arg2[%c0, %c0_0, %c0_1] : memref<1x8x32xbf16, #tpu.memory_space<vmem>>, vector<1x8x32xbf16>
    %1 = vector.shape_cast %0 : vector<1x8x32xbf16> to vector<8x32xbf16>
    %c0_2 = arith.constant 0 : index
    %c0_3 = arith.constant 0 : index
    %c0_4 = arith.constant 0 : index
    %2 = vector.load %arg3[%c0_2, %c0_3, %c0_4] : memref<1x8x32xbf16, #tpu.memory_space<vmem>>, vector<1x8x32xbf16>
    %3 = vector.shape_cast %2 : vector<1x8x32xbf16> to vector<8x32xbf16>
    %c0_5 = arith.constant 0 : index
    %c0_6 = arith.constant 0 : index
    %4 = vector.load %arg4[%c0_5, %c0_6] : memref<32x32xbf16, #tpu.memory_space<vmem>>, vector<32x32xbf16>
    %cst = arith.constant dense<0.000000e+00> : vector<8x32xf32>
    %5 = tpu.matmul %1, %4, %cst {dimension_numbers = #tpu.dot_dimension_numbers<[1], [0], [0], [1], [0, 0, 1, 1], [], []>} : vector<8x32xbf16>, vector<32x32xbf16>, vector<8x32xf32> -> vector<8x32xf32>
    %c0_7 = arith.constant 0 : index
    %c0_8 = arith.constant 0 : index
    %6 = vector.load %arg5[%c0_7, %c0_8] : memref<1x32xf32, #tpu.memory_space<vmem>>, vector<1x32xf32>
    %7 = vector.broadcast %6 : vector<1x32xf32> to vector<8x32xf32>
    %8 = arith.addf %5, %7 : vector<8x32xf32>
    %cst_9 = arith.constant 0.353553385 : f32
    %9 = vector.broadcast %cst_9 : f32 to vector<8x32xf32>
    %10 = arith.mulf %8, %9 : vector<8x32xf32>
    %c0_10 = arith.constant 0 : index
    %c0_11 = arith.constant 0 : index
    %11 = vector.load %arg6[%c0_10, %c0_11] : memref<32x64xbf16, #tpu.memory_space<vmem>>, vector<32x64xbf16>
    %cst_12 = arith.constant dense<0.000000e+00> : vector<8x64xf32>
    %12 = tpu.matmul %3, %11, %cst_12 {dimension_numbers = #tpu.dot_dimension_numbers<[1], [0], [0], [1], [0, 0, 1, 1], [], []>} : vector<8x32xbf16>, vector<32x64xbf16>, vector<8x64xf32> -> vector<8x64xf32>
    %c0_13 = arith.constant 0 : index
    %c0_14 = arith.constant 0 : index
    %13 = vector.load %arg7[%c0_13, %c0_14] : memref<1x64xf32, #tpu.memory_space<vmem>>, vector<1x64xf32>
    %14 = vector.broadcast %13 : vector<1x64xf32> to vector<8x64xf32>
    %15 = arith.addf %12, %14 : vector<8x64xf32>
    %16 = vector.extract_strided_slice %15 {offsets = [0, 0], sizes = [8, 32], strides = [1, 1]} : vector<8x64xf32> to vector<8x32xf32>
    %17 = vector.extract_strided_slice %15 {offsets = [0, 32], sizes = [8, 32], strides = [1, 1]} : vector<8x64xf32> to vector<8x32xf32>
    %c8_i32 = arith.constant 8 : i32
    %18 = arith.muli %arg1, %c8_i32 : i32
    %19 = tpu.iota {dimensions = array<i32: 0>} : vector<8x8xi32>
    %20 = vector.broadcast %18 : i32 to vector<8x8xi32>
    %21 = arith.addi %20, %19 : vector<8x8xi32>
    %22 = tpu.iota {dimensions = array<i32: 1>} : vector<8x8xi32>
    %23 = arith.cmpi sle, %22, %21 : vector<8x8xi32>
    %24 = vector.extract_strided_slice %10 {offsets = [0, 0], sizes = [8, 8], strides = [1, 1]} : vector<8x32xf32> to vector<8x8xf32>
    %25 = arith.truncf %24 : vector<8x8xf32> to vector<8x8xbf16>
    %26 = vector.extract_strided_slice %16 {offsets = [0, 0], sizes = [8, 8], strides = [1, 1]} : vector<8x32xf32> to vector<8x8xf32>
    %27 = arith.truncf %26 : vector<8x8xf32> to vector<8x8xbf16>
    %28 = vector.extract_strided_slice %17 {offsets = [0, 0], sizes = [8, 8], strides = [1, 1]} : vector<8x32xf32> to vector<8x8xf32>
    %29 = arith.truncf %28 : vector<8x8xf32> to vector<8x8xbf16>
    %cst_15 = arith.constant dense<0.000000e+00> : vector<8x8xf32>
    %30 = tpu.matmul %25, %27, %cst_15 {dimension_numbers = #tpu.dot_dimension_numbers<[1], [1], [0], [0], [0, 0, 1, 0], [], []>} : vector<8x8xbf16>, vector<8x8xbf16>, vector<8x8xf32> -> vector<8x8xf32>
    %cst_16 = arith.constant -2.38197633E+38 : f32
    %31 = vector.broadcast %cst_16 : f32 to vector<8x8xf32>
    %32 = arith.select %23, %30, %31 : vector<8x8xi1>, vector<8x8xf32>
    %cst_17 = arith.constant dense<0xFF800000> : vector<8xf32>
    %33 = vector.multi_reduction <maximumf>, %32, %cst_17 [1] : vector<8x8xf32> to vector<8xf32>
    %34 = vector.shape_cast %33 : vector<8xf32> to vector<8x1xf32>
    %35 = vector.broadcast %34 : vector<8x1xf32> to vector<8x8xf32>
    %36 = arith.subf %32, %35 : vector<8x8xf32>
    %37 = math.exp %36 : vector<8x8xf32>
    %cst_18 = arith.constant dense<0.000000e+00> : vector<8xf32>
    %38 = vector.multi_reduction <add>, %37, %cst_18 [1] : vector<8x8xf32> to vector<8xf32>
    %39 = vector.shape_cast %38 : vector<8xf32> to vector<8x1xf32>
    %cst_19 = arith.constant 1.000000e+00 : f32
    %40 = vector.broadcast %cst_19 : f32 to vector<8x1xf32>
    %41 = arith.divf %40, %39 : vector<8x1xf32>
    %42 = vector.broadcast %41 : vector<8x1xf32> to vector<8x8xf32>
    %43 = arith.mulf %37, %42 : vector<8x8xf32>
    %44 = arith.truncf %43 : vector<8x8xf32> to vector<8x8xbf16>
    %cst_20 = arith.constant dense<0.000000e+00> : vector<8x8xf32>
    %45 = tpu.matmul %44, %29, %cst_20 {dimension_numbers = #tpu.dot_dimension_numbers<[1], [0], [0], [1], [0, 0, 1, 1], [], []>} : vector<8x8xbf16>, vector<8x8xbf16>, vector<8x8xf32> -> vector<8x8xf32>
    %46 = vector.extract_strided_slice %10 {offsets = [0, 8], sizes = [8, 8], strides = [1, 1]} : vector<8x32xf32> to vector<8x8xf32>
    %47 = arith.truncf %46 : vector<8x8xf32> to vector<8x8xbf16>
    %48 = vector.extract_strided_slice %16 {offsets = [0, 8], sizes = [8, 8], strides = [1, 1]} : vector<8x32xf32> to vector<8x8xf32>
    %49 = arith.truncf %48 : vector<8x8xf32> to vector<8x8xbf16>
    %50 = vector.extract_strided_slice %17 {offsets = [0, 8], sizes = [8, 8], strides = [1, 1]} : vector<8x32xf32> to vector<8x8xf32>
    %51 = arith.truncf %50 : vector<8x8xf32> to vector<8x8xbf16>
    %cst_21 = arith.constant dense<0.000000e+00> : vector<8x8xf32>
    %52 = tpu.matmul %47, %49, %cst_21 {dimension_numbers = #tpu.dot_dimension_numbers<[1], [1], [0], [0], [0, 0, 1, 0], [], []>} : vector<8x8xbf16>, vector<8x8xbf16>, vector<8x8xf32> -> vector<8x8xf32>
    %cst_22 = arith.constant -2.38197633E+38 : f32
    %53 = vector.broadcast %cst_22 : f32 to vector<8x8xf32>
    %54 = arith.select %23, %52, %53 : vector<8x8xi1>, vector<8x8xf32>
    %cst_23 = arith.constant dense<0xFF800000> : vector<8xf32>
    %55 = vector.multi_reduction <maximumf>, %54, %cst_23 [1] : vector<8x8xf32> to vector<8xf32>
    %56 = vector.shape_cast %55 : vector<8xf32> to vector<8x1xf32>
    %57 = vector.broadcast %56 : vector<8x1xf32> to vector<8x8xf32>
    %58 = arith.subf %54, %57 : vector<8x8xf32>
    %59 = math.exp %58 : vector<8x8xf32>
    %cst_24 = arith.constant dense<0.000000e+00> : vector<8xf32>
    %60 = vector.multi_reduction <add>, %59, %cst_24 [1] : vector<8x8xf32> to vector<8xf32>
    %61 = vector.shape_cast %60 : vector<8xf32> to vector<8x1xf32>
    %cst_25 = arith.constant 1.000000e+00 : f32
    %62 = vector.broadcast %cst_25 : f32 to vector<8x1xf32>
    %63 = arith.divf %62, %61 : vector<8x1xf32>
    %64 = vector.broadcast %63 : vector<8x1xf32> to vector<8x8xf32>
    %65 = arith.mulf %59, %64 : vector<8x8xf32>
    %66 = arith.truncf %65 : vector<8x8xf32> to vector<8x8xbf16>
    %cst_26 = arith.constant dense<0.000000e+00> : vector<8x8xf32>
    %67 = tpu.matmul %66, %51, %cst_26 {dimension_numbers = #tpu.dot_dimension_numbers<[1], [0], [0], [1], [0, 0, 1, 1], [], []>} : vector<8x8xbf16>, vector<8x8xbf16>, vector<8x8xf32> -> vector<8x8xf32>
    %68 = vector.extract_strided_slice %10 {offsets = [0, 16], sizes = [8, 8], strides = [1, 1]} : vector<8x32xf32> to vector<8x8xf32>
    %69 = arith.truncf %68 : vector<8x8xf32> to vector<8x8xbf16>
    %70 = vector.extract_strided_slice %16 {offsets = [0, 16], sizes = [8, 8], strides = [1, 1]} : vector<8x32xf32> to vector<8x8xf32>
    %71 = arith.truncf %70 : vector<8x8xf32> to vector<8x8xbf16>
    %72 = vector.extract_strided_slice %17 {offsets = [0, 16], sizes = [8, 8], strides = [1, 1]} : vector<8x32xf32> to vector<8x8xf32>
    %73 = arith.truncf %72 : vector<8x8xf32> to vector<8x8xbf16>
    %cst_27 = arith.constant dense<0.000000e+00> : vector<8x8xf32>
    %74 = tpu.matmul %69, %71, %cst_27 {dimension_numbers = #tpu.dot_dimension_numbers<[1], [1], [0], [0], [0, 0, 1, 0], [], []>} : vector<8x8xbf16>, vector<8x8xbf16>, vector<8x8xf32> -> vector<8x8xf32>
    %cst_28 = arith.constant -2.38197633E+38 : f32
    %75 = vector.broadcast %cst_28 : f32 to vector<8x8xf32>
    %76 = arith.select %23, %74, %75 : vector<8x8xi1>, vector<8x8xf32>
    %cst_29 = arith.constant dense<0xFF800000> : vector<8xf32>
    %77 = vector.multi_reduction <maximumf>, %76, %cst_29 [1] : vector<8x8xf32> to vector<8xf32>
    %78 = vector.shape_cast %77 : vector<8xf32> to vector<8x1xf32>
    %79 = vector.broadcast %78 : vector<8x1xf32> to vector<8x8xf32>
    %80 = arith.subf %76, %79 : vector<8x8xf32>
    %81 = math.exp %80 : vector<8x8xf32>
    %cst_30 = arith.constant dense<0.000000e+00> : vector<8xf32>
    %82 = vector.multi_reduction <add>, %81, %cst_30 [1] : vector<8x8xf32> to vector<8xf32>
    %83 = vector.shape_cast %82 : vector<8xf32> to vector<8x1xf32>
    %cst_31 = arith.constant 1.000000e+00 : f32
    %84 = vector.broadcast %cst_31 : f32 to vector<8x1xf32>
    %85 = arith.divf %84, %83 : vector<8x1xf32>
    %86 = vector.broadcast %85 : vector<8x1xf32> to vector<8x8xf32>
    %87 = arith.mulf %81, %86 : vector<8x8xf32>
    %88 = arith.truncf %87 : vector<8x8xf32> to vector<8x8xbf16>
    %cst_32 = arith.constant dense<0.000000e+00> : vector<8x8xf32>
    %89 = tpu.matmul %88, %73, %cst_32 {dimension_numbers = #tpu.dot_dimension_numbers<[1], [0], [0], [1], [0, 0, 1, 1], [], []>} : vector<8x8xbf16>, vector<8x8xbf16>, vector<8x8xf32> -> vector<8x8xf32>
    %90 = vector.extract_strided_slice %10 {offsets = [0, 24], sizes = [8, 8], strides = [1, 1]} : vector<8x32xf32> to vector<8x8xf32>
    %91 = arith.truncf %90 : vector<8x8xf32> to vector<8x8xbf16>
    %92 = vector.extract_strided_slice %16 {offsets = [0, 24], sizes = [8, 8], strides = [1, 1]} : vector<8x32xf32> to vector<8x8xf32>
    %93 = arith.truncf %92 : vector<8x8xf32> to vector<8x8xbf16>
    %94 = vector.extract_strided_slice %17 {offsets = [0, 24], sizes = [8, 8], strides = [1, 1]} : vector<8x32xf32> to vector<8x8xf32>
    %95 = arith.truncf %94 : vector<8x8xf32> to vector<8x8xbf16>
    %cst_33 = arith.constant dense<0.000000e+00> : vector<8x8xf32>
    %96 = tpu.matmul %91, %93, %cst_33 {dimension_numbers = #tpu.dot_dimension_numbers<[1], [1], [0], [0], [0, 0, 1, 0], [], []>} : vector<8x8xbf16>, vector<8x8xbf16>, vector<8x8xf32> -> vector<8x8xf32>
    %cst_34 = arith.constant -2.38197633E+38 : f32
    %97 = vector.broadcast %cst_34 : f32 to vector<8x8xf32>
    %98 = arith.select %23, %96, %97 : vector<8x8xi1>, vector<8x8xf32>
    %cst_35 = arith.constant dense<0xFF800000> : vector<8xf32>
    %99 = vector.multi_reduction <maximumf>, %98, %cst_35 [1] : vector<8x8xf32> to vector<8xf32>
    %100 = vector.shape_cast %99 : vector<8xf32> to vector<8x1xf32>
    %101 = vector.broadcast %100 : vector<8x1xf32> to vector<8x8xf32>
    %102 = arith.subf %98, %101 : vector<8x8xf32>
    %103 = math.exp %102 : vector<8x8xf32>
    %cst_36 = arith.constant dense<0.000000e+00> : vector<8xf32>
    %104 = vector.multi_reduction <add>, %103, %cst_36 [1] : vector<8x8xf32> to vector<8xf32>
    %105 = vector.shape_cast %104 : vector<8xf32> to vector<8x1xf32>
    %cst_37 = arith.constant 1.000000e+00 : f32
    %106 = vector.broadcast %cst_37 : f32 to vector<8x1xf32>
    %107 = arith.divf %106, %105 : vector<8x1xf32>
    %108 = vector.broadcast %107 : vector<8x1xf32> to vector<8x8xf32>
    %109 = arith.mulf %103, %108 : vector<8x8xf32>
    %110 = arith.truncf %109 : vector<8x8xf32> to vector<8x8xbf16>
    %cst_38 = arith.constant dense<0.000000e+00> : vector<8x8xf32>
    %111 = tpu.matmul %110, %95, %cst_38 {dimension_numbers = #tpu.dot_dimension_numbers<[1], [0], [0], [1], [0, 0, 1, 1], [], []>} : vector<8x8xbf16>, vector<8x8xbf16>, vector<8x8xf32> -> vector<8x8xf32>
    %112 = tpu.concatenate %45, %67, %89, %111 in 1 : vector<8x8xf32>, vector<8x8xf32>, vector<8x8xf32>, vector<8x8xf32> -> vector<8x32xf32>
    %113 = arith.truncf %112 : vector<8x32xf32> to vector<8x32xbf16>
    %c0_39 = arith.constant 0 : index
    %c0_40 = arith.constant 0 : index
    %114 = vector.load %arg8[%c0_39, %c0_40] : memref<32x32xbf16, #tpu.memory_space<vmem>>, vector<32x32xbf16>
    %cst_41 = arith.constant dense<0.000000e+00> : vector<8x32xf32>
    %115 = tpu.matmul %113, %114, %cst_41 {dimension_numbers = #tpu.dot_dimension_numbers<[1], [0], [0], [1], [0, 0, 1, 1], [], []>} : vector<8x32xbf16>, vector<32x32xbf16>, vector<8x32xf32> -> vector<8x32xf32>
    %c0_42 = arith.constant 0 : index
    %c0_43 = arith.constant 0 : index
    %116 = vector.load %arg9[%c0_42, %c0_43] : memref<1x32xf32, #tpu.memory_space<vmem>>, vector<1x32xf32>
    %117 = vector.broadcast %116 : vector<1x32xf32> to vector<8x32xf32>
    %118 = arith.addf %115, %117 : vector<8x32xf32>
    %c0_44 = arith.constant 0 : index
    %c0_45 = arith.constant 0 : index
    %c0_46 = arith.constant 0 : index
    %119 = vector.load %arg10[%c0_44, %c0_45, %c0_46] : memref<1x8x32xf32, #tpu.memory_space<vmem>>, vector<1x8x32xf32>
    %120 = vector.shape_cast %119 : vector<1x8x32xf32> to vector<8x32xf32>
    %121 = vector.shape_cast %118 : vector<8x32xf32> to vector<1x8x32xf32>
    tpu.vector_store %arg10[%c0_44, %c0_45, %c0_46], %121 {strides = array<i32>} : memref<1x8x32xf32, #tpu.memory_space<vmem>>, vector<1x8x32xf32>,
    return
  }
  func.func @transform_0(%arg0: i32, %arg1: i32) -> (i32, i32, i32) {
    %c0_i32 = arith.constant 0 : i32
    %c0_i32_0 = arith.constant 0 : i32
    return %arg0, %arg1, %c0_i32 : i32, i32, i32
  }
  func.func @transform_1(%arg0: i32, %arg1: i32) -> (i32, i32, i32) {
    %c0_i32 = arith.constant 0 : i32
    %c0_i32_0 = arith.constant 0 : i32
    %c0_i32_1 = arith.constant 0 : i32
    return %arg0, %c0_i32, %c0_i32_0 : i32, i32, i32
  }
  func.func @transform_2(%arg0: i32, %arg1: i32) -> (i32, i32) {
    %c0_i32 = arith.constant 0 : i32
    %c0_i32_0 = arith.constant 0 : i32
    %c0_i32_1 = arith.constant 0 : i32
    return %c0_i32, %c0_i32_0 : i32, i32
  }
  func.func @transform_3(%arg0: i32, %arg1: i32) -> (i32, i32) {
    %c0_i32 = arith.constant 0 : i32
    %c0_i32_0 = arith.constant 0 : i32
    %c0_i32_1 = arith.constant 0 : i32
    return %c0_i32, %c0_i32_0 : i32, i32
  }
  func.func @transform_4(%arg0: i32, %arg1: i32) -> (i32, i32) {
    %c0_i32 = arith.constant 0 : i32
    %c0_i32_0 = arith.constant 0 : i32
    %c0_i32_1 = arith.constant 0 : i32
    return %c0_i32, %c0_i32_0 : i32, i32
  }
  func.func @transform_5(%arg0: i32, %arg1: i32) -> (i32, i32) {
    %c0_i32 = arith.constant 0 : i32
    %c0_i32_0 = arith.constant 0 : i32
    %c0_i32_1 = arith.constant 0 : i32
    return %c0_i32, %c0_i32_0 : i32, i32
  }
  func.func @transform_6(%arg0: i32, %arg1: i32) -> (i32, i32) {
    %c0_i32 = arith.constant 0 : i32
    %c0_i32_0 = arith.constant 0 : i32
    %c0_i32_1 = arith.constant 0 : i32
    return %c0_i32, %c0_i32_0 : i32, i32
  }
  func.func @transform_7(%arg0: i32, %arg1: i32) -> (i32, i32) {
    %c0_i32 = arith.constant 0 : i32
    %c0_i32_0 = arith.constant 0 : i32
    %c0_i32_1 = arith.constant 0 : i32
    return %c0_i32, %c0_i32_0 : i32, i32
  }
  func.func @transform_8(%arg0: i32, %arg1: i32) -> (i32, i32, i32) {
    %c0_i32 = arith.constant 0 : i32
    %c0_i32_0 = arith.constant 0 : i32
    return %arg0, %arg1, %c0_i32 : i32, i32, i32
  }
}

</mosaic_0001>

<llo_original>
// kernel: tpu_custom_call.1
$region0: #{tpu_custom_call.1}
  #allocation0 [shape = 'u32[]', space=smem, size = 0x4, offset = 0x4, fixed_abs, tag = 'smem constant byte address 0x4 - core index']
  #allocation1 [shape = 'u32[144,128]{1,0:T(1,128)}', space=vmem, size = 0x12000, scoped, tag = 'internal scratch']
  %s0 = inlined_call_operand.hbm [shape: bf16[2,8,32], index: 0, kind: input, shape index: {}]
  %s1 = inlined_call_operand.hbm [shape: bf16[2,8,32], index: 1, kind: input, shape index: {}]
  %s2 = inlined_call_operand.hbm [shape: bf16[32,32], index: 2, kind: input, shape index: {}]
  %s3 = inlined_call_operand.vmem [shape: f32[1,32], index: 3, kind: input, shape index: {}]
  %s4 = inlined_call_operand.hbm [shape: bf16[32,64], index: 4, kind: input, shape index: {}]
  %s5 = inlined_call_operand.vmem [shape: f32[1,64], index: 5, kind: input, shape index: {}]
  %s6 = inlined_call_operand.vmem [shape: bf16[32,32], index: 6, kind: input, shape index: {}]
  %s7 = inlined_call_operand.vmem [shape: f32[1,32], index: 7, kind: input, shape index: {}]
  %s8 = inlined_call_operand.hbm [shape: f32[2,8,32], index: 8, kind: output, shape index: {}]
  %s9 = sld [smem:[#allocation0]]
  $region81: #{tpu_custom_call.1} parent=0
    _
  %s11 = ssub.s32 1, %s9
  %s12 = scalar_select 0, %s11, %s9
  $region1: #{tpu_custom_call.1} parent=0
    #allocation2 [shape = 'u8[4096]{0}', space=vmem, size = 0x1000, scoped, tag = 'input window, operand 0']
    #allocation3 [shape = 's32[2]{0}', space=sflag, size = 0x8, scoped, tag = 'scoped memory for tpu_custom_call.1']
    #allocation4 [shape = 's32[2]{0}', space=sflag, size = 0x8, scoped, tag = 'scoped memory for tpu_custom_call.1']
    #allocation5 [shape = 'u8[4096]{0}', space=vmem, size = 0x1000, scoped, tag = 'input window, operand 1']
    #allocation6 [shape = 's32[2]{0}', space=sflag, size = 0x8, scoped, tag = 'scoped memory for tpu_custom_call.1']
    #allocation7 [shape = 'u8[8192]{0}', space=vmem, size = 0x2000, scoped, tag = 'input window, operand 2, single buffered']
    #allocation8 [shape = 'u8[8192]{0}', space=vmem, size = 0x2000, scoped, tag = 'input window, operand 4, single buffered']
    #allocation9 [shape = 's32[1]{0}', space=sflag, size = 0x4, scoped, tag = 'scoped memory for tpu_custom_call.1']
    #allocation10 [shape = 'u8[8192]{0}', space=vmem, size = 0x2000, scoped, tag = 'output window, operand 0']
    %13 = vsyncpa [#allocation3], 0
    %s14 = scalar_lea.sflag [#allocation3], 1
    %15 = vsyncpa %s14, 0
    %16 = vsyncpa [#allocation6], 0
    %s17 = scalar_lea.sflag [#allocation6], 1
    %18 = vsyncpa %s17, 0
    %19 = vsyncpa [#allocation9], 0
    %20 = vsyncpa [#allocation4], 0
    %s21 = scalar_lea.sflag [#allocation4], 1
    %22 = vsyncpa %s21, 0
    loop: start=0, step=1, limit=4
    $region2: #{tpu_custom_call.1} parent=1 // loop_pre_header
      _
    $region3: #{tpu_custom_call.1} parent=1 // loop_header
      %s24 = sphi 0, %s28
      %p25 = scmp.ge.s32.totalorder %s24, 4
      %s31 = sphi 0, %s43
      %s32 = sphi 0, %s39
      %s33 = sphi 0, %s31
      %s34 = sphi 0, %s32
      %s35 = sphi 0, %s33
      %s36 = sphi 0, %s34
      %s48 = sphi 0, %s50
      %s51 = sphi 0, %s48
      %s52 = sphi 0, %s51
      %s68 = sphi 0, %s52
      %s74 = sphi 0, %s76
      %s77 = sphi 0, %s74
      %s78 = sphi 0, %s77
      %s94 = sphi 0, %s78
      %s98 = sphi 0, %s98
      %s100 = sphi 0, %s98
      %s101 = sphi 0, %s100
      %s115 = sphi 0, %s101
      %s119 = sphi 0, %s119
      %s121 = sphi 0, %s119
      %s122 = sphi 0, %s121
      %s136 = sphi 0, %s122
      %s140 = sphi 0, %s140
      %s142 = sphi 0, %s140
      %s143 = sphi 0, %s142
      %s157 = sphi 0, %s143
      %s161 = sphi 0, %s161
      %s163 = sphi 0, %s161
      %s164 = sphi 0, %s163
      %s178 = sphi 0, %s164
      %s182 = sphi 0, %s182
      %s184 = sphi 0, %s182
      %s185 = sphi 0, %s184
      %s199 = sphi 0, %s185
      %s203 = sphi 0, %s203
      %s205 = sphi 0, %s203
      %s206 = sphi 0, %s205
      %s220 = sphi 0, %s206
      %s228 = sphi 0, %s230
      %s231 = sphi 0, %s228
      %s232 = sphi 0, %s231
      %s248 = sphi 0, %s232
    $region4: #{tpu_custom_call.1} parent=1 // loop_header_branch
      %27 = sbr.rel (%p25) target = $region8
    $region5: #{tpu_custom_call.1} parent=1 // loop_body
      %s29 = ssub.s32 %s24, 1
      %s30 = ssub.s32 %s24, 2
      %s37 = sadd.s32 1, %s32
      %p38 = scmp.ge.s32.totalorder %s37, 1
      %s39 = scalar_select %p38, 0, %s37
      %s40 = sadd.s32 1, %s31
      %s41 = scalar_select %p38, %s40, %s31
      %p42 = scmp.ge.s32.totalorder %s41, 2
      %s43 = scalar_select %p42, 0, %s41
      %s44 = ssub.s32 %s31, %s43
      %s45 = ssub.s32 %s32, %s39
      %s46 = sor.u32 %s44, %s45
      %p47 = scmp.eq.s32.totalorder %s46, 0
      %s49 = sadd.s32 %s48, 1
      %s50 = scalar_select %p47, %s48, %s49
      %p53 = pneg %p47
      %p54 = scmp.eq.s32.totalorder %s24, 1
      %p55 = por %p53, %p54
      %p56 = scmp.ne.s32.totalorder %s48, %s51
      %p57 = scmp.eq.s32.totalorder %s24, 0
      %p58 = por %p56, %p57
      %p59 = scmp.ne.s32.totalorder %s48, %s51
      %p60 = scmp.eq.s32.totalorder %s29, 1
      %p61 = por %p59, %p60
      %p62 = scmp.ne.s32.totalorder %s51, %s52
      %p63 = scmp.eq.s32.totalorder %s29, 0
      %p64 = por %p62, %p63
      %p65 = scmp.ne.s32.totalorder %s51, %s52
      %p66 = scmp.eq.s32.totalorder %s30, 1
      %p67 = por %p65, %p66
      %p69 = scmp.ne.s32.totalorder %s52, %s68
      %p70 = scmp.eq.s32.totalorder %s30, 0
      %p71 = por %p69, %p70
      %s72 = ssub.s32 %s31, %s43
      %p73 = scmp.eq.s32.totalorder %s72, 0
      %s75 = sadd.s32 %s74, 1
      %s76 = scalar_select %p73, %s74, %s75
      %p79 = pneg %p73
      %p80 = scmp.eq.s32.totalorder %s24, 1
      %p81 = por %p79, %p80
      %p82 = scmp.ne.s32.totalorder %s74, %s77
      %p83 = scmp.eq.s32.totalorder %s24, 0
      %p84 = por %p82, %p83
      %p85 = scmp.ne.s32.totalorder %s74, %s77
      %p86 = scmp.eq.s32.totalorder %s29, 1
      %p87 = por %p85, %p86
      %p88 = scmp.ne.s32.totalorder %s77, %s78
      %p89 = scmp.eq.s32.totalorder %s29, 0
      %p90 = por %p88, %p89
      %p91 = scmp.ne.s32.totalorder %s77, %s78
      %p92 = scmp.eq.s32.totalorder %s30, 1
      %p93 = por %p91, %p92
      %p95 = scmp.ne.s32.totalorder %s78, %s94
      %p96 = scmp.eq.s32.totalorder %s30, 0
      %p97 = por %p95, %p96
      %s99 = sadd.s32 %s98, 1
      %p102 = scmp.eq.s32.totalorder %s24, 1
      %p103 = scmp.ne.s32.totalorder %s98, %s100
      %p104 = scmp.eq.s32.totalorder %s24, 0
      %p105 = por %p103, %p104
      %p106 = scmp.ne.s32.totalorder %s98, %s100
      %p107 = scmp.eq.s32.totalorder %s29, 1
      %p108 = por %p106, %p107
      %p109 = scmp.ne.s32.totalorder %s100, %s101
      %p110 = scmp.eq.s32.totalorder %s29, 0
      %p111 = por %p109, %p110
      %p112 = scmp.ne.s32.totalorder %s100, %s101
      %p113 = scmp.eq.s32.totalorder %s30, 1
      %p114 = por %p112, %p113
      %p116 = scmp.ne.s32.totalorder %s101, %s115
      %p117 = scmp.eq.s32.totalorder %s30, 0
      %p118 = por %p116, %p117
      %s120 = sadd.s32 %s119, 1
      %p123 = scmp.eq.s32.totalorder %s24, 1
      %p124 = scmp.ne.s32.totalorder %s119, %s121
      %p125 = scmp.eq.s32.totalorder %s24, 0
      %p126 = por %p124, %p125
      %p127 = scmp.ne.s32.totalorder %s119, %s121
      %p128 = scmp.eq.s32.totalorder %s29, 1
      %p129 = por %p127, %p128
      %p130 = scmp.ne.s32.totalorder %s121, %s122
      %p131 = scmp.eq.s32.totalorder %s29, 0
      %p132 = por %p130, %p131
      %p133 = scmp.ne.s32.totalorder %s121, %s122
      %p134 = scmp.eq.s32.totalorder %s30, 1
      %p135 = por %p133, %p134
      %p137 = scmp.ne.s32.totalorder %s122, %s136
      %p138 = scmp.eq.s32.totalorder %s30, 0
      %p139 = por %p137, %p138
      %s141 = sadd.s32 %s140, 1
      %p144 = scmp.eq.s32.totalorder %s24, 1
      %p145 = scmp.ne.s32.totalorder %s140, %s142
      %p146 = scmp.eq.s32.totalorder %s24, 0
      %p147 = por %p145, %p146
      %p148 = scmp.ne.s32.totalorder %s140, %s142
      %p149 = scmp.eq.s32.totalorder %s29, 1
      %p150 = por %p148, %p149
      %p151 = scmp.ne.s32.totalorder %s142, %s143
      %p152 = scmp.eq.s32.totalorder %s29, 0
      %p153 = por %p151, %p152
      %p154 = scmp.ne.s32.totalorder %s142, %s143
      %p155 = scmp.eq.s32.totalorder %s30, 1
      %p156 = por %p154, %p155
      %p158 = scmp.ne.s32.totalorder %s143, %s157
      %p159 = scmp.eq.s32.totalorder %s30, 0
      %p160 = por %p158, %p159
      %s162 = sadd.s32 %s161, 1
      %p165 = scmp.eq.s32.totalorder %s24, 1
      %p166 = scmp.ne.s32.totalorder %s161, %s163
      %p167 = scmp.eq.s32.totalorder %s24, 0
      %p168 = por %p166, %p167
      %p169 = scmp.ne.s32.totalorder %s161, %s163
      %p170 = scmp.eq.s32.totalorder %s29, 1
      %p171 = por %p169, %p170
      %p172 = scmp.ne.s32.totalorder %s163, %s164
      %p173 = scmp.eq.s32.totalorder %s29, 0
      %p174 = por %p172, %p173
      %p175 = scmp.ne.s32.totalorder %s163, %s164
      %p176 = scmp.eq.s32.totalorder %s30, 1
      %p177 = por %p175, %p176
      %p179 = scmp.ne.s32.totalorder %s164, %s178
      %p180 = scmp.eq.s32.totalorder %s30, 0
      %p181 = por %p179, %p180
      %s183 = sadd.s32 %s182, 1
      %p186 = scmp.eq.s32.totalorder %s24, 1
      %p187 = scmp.ne.s32.totalorder %s182, %s184
      %p188 = scmp.eq.s32.totalorder %s24, 0
      %p189 = por %p187, %p188
      %p190 = scmp.ne.s32.totalorder %s182, %s184
      %p191 = scmp.eq.s32.totalorder %s29, 1
      %p192 = por %p190, %p191
      %p193 = scmp.ne.s32.totalorder %s184, %s185
      %p194 = scmp.eq.s32.totalorder %s29, 0
      %p195 = por %p193, %p194
      %p196 = scmp.ne.s32.totalorder %s184, %s185
      %p197 = scmp.eq.s32.totalorder %s30, 1
      %p198 = por %p196, %p197
      %p200 = scmp.ne.s32.totalorder %s185, %s199
      %p201 = scmp.eq.s32.totalorder %s30, 0
      %p202 = por %p200, %p201
      %s204 = sadd.s32 %s203, 1
      %p207 = scmp.eq.s32.totalorder %s24, 1
      %p208 = scmp.ne.s32.totalorder %s203, %s205
      %p209 = scmp.eq.s32.totalorder %s24, 0
      %p210 = por %p208, %p209
      %p211 = scmp.ne.s32.totalorder %s203, %s205
      %p212 = scmp.eq.s32.totalorder %s29, 1
      %p213 = por %p211, %p212
      %p214 = scmp.ne.s32.totalorder %s205, %s206
      %p215 = scmp.eq.s32.totalorder %s29, 0
      %p216 = por %p214, %p215
      %p217 = scmp.ne.s32.totalorder %s205, %s206
      %p218 = scmp.eq.s32.totalorder %s30, 1
      %p219 = por %p217, %p218
      %p221 = scmp.ne.s32.totalorder %s206, %s220
      %p222 = scmp.eq.s32.totalorder %s30, 0
      %p223 = por %p221, %p222
      %s224 = ssub.s32 %s31, %s43
      %s225 = ssub.s32 %s32, %s39
      %s226 = sor.u32 %s224, %s225
      %p227 = scmp.eq.s32.totalorder %s226, 0
      %s229 = sadd.s32 %s228, 1
      %s230 = scalar_select %p227, %s228, %s229
      %p233 = pneg %p227
      %p234 = scmp.eq.s32.totalorder %s24, 1
      %p235 = por %p233, %p234
      %p236 = scmp.ne.s32.totalorder %s228, %s231
      %p237 = scmp.eq.s32.totalorder %s24, 0
      %p238 = por %p236, %p237
      %p239 = scmp.ne.s32.totalorder %s228, %s231
      %p240 = scmp.eq.s32.totalorder %s29, 1
      %p241 = por %p239, %p240
      %p242 = scmp.ne.s32.totalorder %s231, %s232
      %p243 = scmp.eq.s32.totalorder %s29, 0
      %p244 = por %p242, %p243
      %p245 = scmp.ne.s32.totalorder %s231, %s232
      %p246 = scmp.eq.s32.totalorder %s30, 1
      %p247 = por %p245, %p246
      %p249 = scmp.ne.s32.totalorder %s232, %s248
      %p250 = scmp.eq.s32.totalorder %s30, 0
      %p251 = por %p249, %p250
      %p252 = scmp.le.s32.totalorder 1, %s24
      %p253 = scmp.lt.s32.totalorder %s24, 3
      %p254 = pnand %p252, %p253
      %p255 = pneg %p254
      // Predicated region
      $region9: #{tpu_custom_call.1} parent=5 // pred_check
        _
      $region10: #{tpu_custom_call.1} parent=5 // pred_check_branch
        %257 = sbr.rel (%p254) target = $region12
      $region11: #{tpu_custom_call.1} parent=5 // pred_region
        %s258 = ssub.s32 %s24, 1
        // Predicated region
        $region13: #{tpu_custom_call.1} parent=11 // pred_check
          %p259 = pneg %p111
        $region14: #{tpu_custom_call.1} parent=11 // pred_check_branch
          %261 = sbr.rel (%p259) target = $region16
        $region15: #{tpu_custom_call.1} parent=11 // pred_region
          %s263 = ssub.s32 256, 256
          %264 = vsyncadd [#allocation6], %s263
          %s265 = sshll.u32 [#allocation7], 4
          %s266 = int_to_ptr.vmem [resolvable:$true] %s265
          %271 = dma.hbm_to_vmem [thread:$0]  %s2, 256, %s266, [#allocation6], 64, 64, 4
        $region16: #{tpu_custom_call.1} parent=11 // pred_fallthru
          _
        // Predicated region
        $region17: #{tpu_custom_call.1} parent=11 // pred_check
          %p272 = pneg %p132
        $region18: #{tpu_custom_call.1} parent=11 // pred_check_branch
          %274 = sbr.rel (%p272) target = $region20
        $region19: #{tpu_custom_call.1} parent=11 // pred_region
          _
        $region20: #{tpu_custom_call.1} parent=11 // pred_fallthru
          _
        // Predicated region
        $region21: #{tpu_custom_call.1} parent=11 // pred_check
          %p275 = pneg %p153
        $region22: #{tpu_custom_call.1} parent=11 // pred_check_branch
          %277 = sbr.rel (%p275) target = $region24
        $region23: #{tpu_custom_call.1} parent=11 // pred_region
          %s279 = ssub.s32 256, 256
          %280 = vsyncadd [#allocation9], %s279
          %s281 = sshll.u32 [#allocation8], 4
          %s282 = int_to_ptr.vmem [resolvable:$true] %s281
          %287 = dma.hbm_to_vmem [thread:$0]  %s4, 256, %s282, [#allocation9], 64, 64, 4
        $region24: #{tpu_custom_call.1} parent=11 // pred_fallthru
          _
        // Predicated region
        $region25: #{tpu_custom_call.1} parent=11 // pred_check
          %p288 = pneg %p174
        $region26: #{tpu_custom_call.1} parent=11 // pred_check_branch
          %290 = sbr.rel (%p288) target = $region28
        $region27: #{tpu_custom_call.1} parent=11 // pred_region
          _
        $region28: #{tpu_custom_call.1} parent=11 // pred_fallthru
          _
        // Predicated region
        $region29: #{tpu_custom_call.1} parent=11 // pred_check
          %p291 = pneg %p195
        $region30: #{tpu_custom_call.1} parent=11 // pred_check_branch
          %293 = sbr.rel (%p291) target = $region32
        $region31: #{tpu_custom_call.1} parent=11 // pred_region
          _
        $region32: #{tpu_custom_call.1} parent=11 // pred_fallthru
          _
        // Predicated region
        $region33: #{tpu_custom_call.1} parent=11 // pred_check
          %p294 = pneg %p216
        $region34: #{tpu_custom_call.1} parent=11 // pred_check_branch
          %296 = sbr.rel (%p294) target = $region36
        $region35: #{tpu_custom_call.1} parent=11 // pred_region
          _
        $region36: #{tpu_custom_call.1} parent=11 // pred_fallthru
          _
      $region12: #{tpu_custom_call.1} parent=5 // pred_fallthru
        _
      %p297 = scmp.lt.s32.totalorder %s24, 2
      // Predicated region
      $region37: #{tpu_custom_call.1} parent=5 // pred_check
        %p298 = pneg %p297
      $region38: #{tpu_custom_call.1} parent=5 // pred_check_branch
        %300 = sbr.rel (%p298) target = $region40
      $region39: #{tpu_custom_call.1} parent=5 // pred_region
        // Predicated region
        $region41: #{tpu_custom_call.1} parent=39 // pred_check
          %p301 = pneg %p58
        $region42: #{tpu_custom_call.1} parent=39 // pred_check_branch
          %303 = sbr.rel (%p301) target = $region44
        $region43: #{tpu_custom_call.1} parent=39 // pred_region
          %s304 = sand.u32 %s48, 1
          %s305 = scalar_lea.sflag [#allocation3], %s304
          %s306 = sand.u32 %s48, 1
          %s307 = smul.addr %s306, 4
          %s308 = scalar_lea.vmem [#allocation2], %s307
          %s310 = ssub.s32 64, 64
          %311 = vsyncadd %s305, %s310
          %s312 = sadd.s32 %s32, %s31
          %s313 = smul.addr %s312, 64
          %s314 = scalar_lea.hbm %s0, %s313
          %s316 = sshll.u32 %s308, 4
          %s317 = int_to_ptr.vmem [resolvable:$true] %s316
          %319 = dma.hbm_to_vmem [thread:$0]  %s314, 64, %s317, %s305
        $region44: #{tpu_custom_call.1} parent=39 // pred_fallthru
          _
        // Predicated region
        $region45: #{tpu_custom_call.1} parent=39 // pred_check
          %p320 = pneg %p84
        $region46: #{tpu_custom_call.1} parent=39 // pred_check_branch
          %322 = sbr.rel (%p320) target = $region48
        $region47: #{tpu_custom_call.1} parent=39 // pred_region
          %s323 = sand.u32 %s24, 1
          %s324 = scalar_lea.sflag [#allocation6], %s323
          %s325 = sand.u32 %s74, 1
          %s326 = smul.addr %s325, 4
          %s327 = scalar_lea.vmem [#allocation5], %s326
          %s329 = ssub.s32 64, 64
          %330 = vsyncadd %s324, %s329
          %s331 = smul.addr %s31, 64
          %s332 = scalar_lea.hbm %s1, %s331
          %s334 = sshll.u32 %s327, 4
          %s335 = int_to_ptr.vmem [resolvable:$true] %s334
          %337 = dma.hbm_to_vmem [thread:$0]  %s332, 64, %s335, %s324
        $region48: #{tpu_custom_call.1} parent=39 // pred_fallthru
          _
      $region40: #{tpu_custom_call.1} parent=5 // pred_fallthru
        _
      %p338 = scmp.le.s32.totalorder 1, %s24
      %p339 = scmp.lt.s32.totalorder %s24, 3
      %p340 = pnand %p338, %p339
      %p341 = pneg %p340
      // Predicated region
      $region49: #{tpu_custom_call.1} parent=5 // pred_check
        _
      $region50: #{tpu_custom_call.1} parent=5 // pred_check_branch
        %343 = sbr.rel (%p340) target = $region52
      $region51: #{tpu_custom_call.1} parent=5 // pred_region
        %s344 = ssub.s32 %s24, 1
        %s345 = sand.u32 %s51, 1
        %s346 = scalar_lea.sflag [#allocation3], %s345
        %s347 = sand.u32 %s51, 1
        %s348 = smul.addr %s347, 4
        %s349 = scalar_lea.vmem [#allocation2], %s348
        // Predicated region
        $region53: #{tpu_custom_call.1} parent=51 // pred_check
          %p350 = pneg %p64
        $region54: #{tpu_custom_call.1} parent=51 // pred_check_branch
          %352 = sbr.rel (%p350) target = $region56
        $region55: #{tpu_custom_call.1} parent=51 // pred_region
          %353 = dma.done %s346, 64
        $region56: #{tpu_custom_call.1} parent=51 // pred_fallthru
          _
        %s354 = sand.u32 %s29, 1
        %s355 = scalar_lea.sflag [#allocation6], %s354
        %s356 = sand.u32 %s77, 1
        %s357 = smul.addr %s356, 4
        %s358 = scalar_lea.vmem [#allocation5], %s357
        // Predicated region
        $region57: #{tpu_custom_call.1} parent=51 // pred_check
          %p359 = pneg %p90
        $region58: #{tpu_custom_call.1} parent=51 // pred_check_branch
          %361 = sbr.rel (%p359) target = $region60
        $region59: #{tpu_custom_call.1} parent=51 // pred_region
          %362 = dma.done %s355, 64
        $region60: #{tpu_custom_call.1} parent=51 // pred_fallthru
          _
        // Predicated region
        $region61: #{tpu_custom_call.1} parent=51 // pred_check
          %p363 = pneg %p111
        $region62: #{tpu_custom_call.1} parent=51 // pred_check_branch
          %365 = sbr.rel (%p363) target = $region64
        $region63: #{tpu_custom_call.1} parent=51 // pred_region
          %366 = dma.done [#allocation6], 256
        $region64: #{tpu_custom_call.1} parent=51 // pred_fallthru
          _
        // Predicated region
        $region65: #{tpu_custom_call.1} parent=51 // pred_check
          %p367 = pneg %p153
        $region66: #{tpu_custom_call.1} parent=51 // pred_check_branch
          %369 = sbr.rel (%p367) target = $region68
        $region67: #{tpu_custom_call.1} parent=51 // pred_region
          %370 = dma.done [#allocation9], 256
        $region68: #{tpu_custom_call.1} parent=51 // pred_fallthru
          _
        %s371 = sand.u32 %s51, 1
        %s372 = scalar_lea.sflag [#allocation3], %s371
        %s373 = sand.u32 %s51, 1
        %s374 = smul.addr %s373, 4
        %s375 = scalar_lea.vmem [#allocation2], %s374
        %p376 = pneg %p64
        %p377 = pneg %p61
        %s378 = sand.u32 %s29, 1
        %s379 = scalar_lea.sflag [#allocation6], %s378
        %s380 = sand.u32 %s77, 1
        %s381 = smul.addr %s380, 4
        %s382 = scalar_lea.vmem [#allocation5], %s381
        %p383 = pneg %p90
        %p384 = pneg %p87
        %p385 = pneg %p111
        %p386 = pneg %p108
        %p387 = pneg %p132
        %p388 = pneg %p129
        %p389 = pneg %p153
        %p390 = pneg %p150
        %p391 = pneg %p174
        %p392 = pneg %p171
        %p393 = pneg %p195
        %p394 = pneg %p192
        %p395 = pneg %p216
        %p396 = pneg %p213
        %p397 = pneg %p244
        %p398 = pneg %p241
        %s399 = sand.u32 %s231, 1
        %s400 = scalar_lea.sflag [#allocation4], %s399
        %s401 = sand.u32 %s231, 1
        %s402 = smul.addr %s401, 8
        %s403 = scalar_lea.vmem [#allocation10], %s402
        %v405 = vld [vmem:[%s349] sm:$0xf]
        %v406 = vld [vmem:[%s358] sm:$0xf]
        %v407 = vld [vmem:[#allocation7] sm:$0xf]
        %v408 = vld [vmem:[#allocation7 + $0x4] sm:$0xf]
        %v409 = vld [vmem:[#allocation7 + $0x8] sm:$0xf]
        %v410 = vld [vmem:[#allocation7 + $0xc] sm:$0xf]
        %v411 = vld [vmem:[%s3] sm:$0x1]
        %v413 = vlaneseq
        %v414 = vshrl.u32 %v413, 7
        %v415 = vsub.s32 0, %v414
        %v416 = vrot.slane %v411, %v415
        %v422 = vunpack.c.l.b16 %v407
        %v423 = vunpack.c.l.b16 %v408
        %v424 = vunpack.c.l.b16 %v409
        %v425 = vunpack.c.l.b16 %v410
        %v426 = vpack.c.b16 %v423, %v422
        %v427 = vpack.c.b16 %v425, %v424
        %vm430 = vcmask 261120
        %v432 = vsel %vm430, %v405, 0
        %434 = vmatprep.subr.bf16.mxu0 0
        %435 = vmatpush1.bf16.msra.mxu0 %v426
        %436 = vmatprep.subr.bf16.mxu0 0
        %437 = vmatpush1.bf16.msra.mxu0 %v427
        %438 = vmatprep.subr.bf16.mxu0 0
        %439 = vmatpush1.bf16.msra.mxu0 0
        %440 = vmatprep.subr.bf16.mxu0 0
        %441 = vmatpush1.bf16.msra.mxu0 0
        %442 = vmatprep.subr.bf16.mxu0 0
        %443 = vmatpush1.bf16.msra.mxu0 0
        %444 = vmatprep.subr.bf16.mxu0 0
        %445 = vmatpush1.bf16.msra.mxu0 0
        %446 = vmatprep.subr.bf16.mxu0 0
        %447 = vmatpush1.bf16.msra.mxu0 0
        %448 = vmatprep.subr.bf16.mxu0 0
        %449 = vmatpush1.bf16.msra.mxu0 0
        %450 = vmatprep.subr.bf16.mxu0 0
        %451 = vmatpush1.bf16.msra.mxu0 0
        %452 = vmatprep.subr.bf16.mxu0 0
        %453 = vmatpush1.bf16.msra.mxu0 0
        %454 = vmatprep.subr.bf16.mxu0 0
        %455 = vmatpush1.bf16.msra.mxu0 0
        %456 = vmatprep.subr.bf16.mxu0 0
        %457 = vmatpush1.bf16.msra.mxu0 0
        %458 = vmatprep.subr.bf16.mxu0 0
        %459 = vmatpush1.bf16.msra.mxu0 0
        %460 = vmatprep.subr.bf16.mxu0 0
        %461 = vmatpush1.bf16.msra.mxu0 0
        %462 = vmatprep.subr.bf16.mxu0 0
        %463 = vmatpush1.bf16.msra.mxu0 0
        %464 = vmatprep.subr.bf16.mxu0 0
        %465 = vmatpush1.bf16.msra.mxu0 0
        %466 = vmatprep.mubr.bf16.mxu0 0
        %467 = vmatmul.mubr.bf16.gmra.mrb[0].mxu0 %v432
        %v468 = vpop.f32.mrb[0].mxu0
        %v469 = vadd.f32 %v416, %v468
        %v470 = vpop.f32.mrb[0].mxu0
        %v471 = vpop.f32.mrb[0].mxu0
        %v472 = vpop.f32.mrb[0].mxu0
        %473 = vdwg.mxu0
        %v474 = vmul.f32 %v469, 0.35355338
        %v475 = vld [vmem:[#allocation8] sm:$0xf]
        %v476 = vld [vmem:[#allocation8 + $0x4] sm:$0xf]
        %v477 = vld [vmem:[#allocation8 + $0x8] sm:$0xf]
        %v478 = vld [vmem:[#allocation8 + $0xc] sm:$0xf]
        %v479 = vld [vmem:[%s5] sm:$0x1]
        %v481 = vlaneseq
        %v482 = vshrl.u32 %v481, 7
        %v483 = vsub.s32 0, %v482
        %v484 = vrot.slane %v479, %v483
        %v490 = vunpack.c.l.b16 %v475
        %v491 = vunpack.c.l.b16 %v476
        %v492 = vunpack.c.l.b16 %v477
        %v493 = vunpack.c.l.b16 %v478
        %v494 = vpack.c.b16 %v491, %v490
        %v495 = vpack.c.b16 %v493, %v492
        %v499 = vsel %vm430, %v406, 0
        %501 = vmatprep.subr.bf16.mxu0 0
        %502 = vmatpush1.bf16.msra.mxu0 %v494
        %503 = vmatprep.subr.bf16.mxu0 0
        %504 = vmatpush1.bf16.msra.mxu0 %v495
        %505 = vmatprep.subr.bf16.mxu0 0
        %506 = vmatpush1.bf16.msra.mxu0 0
        %507 = vmatprep.subr.bf16.mxu0 0
        %508 = vmatpush1.bf16.msra.mxu0 0
        %509 = vmatprep.subr.bf16.mxu0 0
        %510 = vmatpush1.bf16.msra.mxu0 0
        %511 = vmatprep.subr.bf16.mxu0 0
        %512 = vmatpush1.bf16.msra.mxu0 0
        %513 = vmatprep.subr.bf16.mxu0 0
        %514 = vmatpush1.bf16.msra.mxu0 0
        %515 = vmatprep.subr.bf16.mxu0 0
        %516 = vmatpush1.bf16.msra.mxu0 0
        %517 = vmatprep.subr.bf16.mxu0 0
        %518 = vmatpush1.bf16.msra.mxu0 0
        %519 = vmatprep.subr.bf16.mxu0 0
        %520 = vmatpush1.bf16.msra.mxu0 0
        %521 = vmatprep.subr.bf16.mxu0 0
        %522 = vmatpush1.bf16.msra.mxu0 0
        %523 = vmatprep.subr.bf16.mxu0 0
        %524 = vmatpush1.bf16.msra.mxu0 0
        %525 = vmatprep.subr.bf16.mxu0 0
        %526 = vmatpush1.bf16.msra.mxu0 0
        %527 = vmatprep.subr.bf16.mxu0 0
        %528 = vmatpush1.bf16.msra.mxu0 0
        %529 = vmatprep.subr.bf16.mxu0 0
        %530 = vmatpush1.bf16.msra.mxu0 0
        %531 = vmatprep.subr.bf16.mxu0 0
        %532 = vmatpush1.bf16.msra.mxu0 0
        %533 = vmatprep.mubr.bf16.mxu0 0
        %534 = vmatmul.mubr.bf16.gmra.mrb[0].mxu0 %v499
        %v535 = vpop.f32.mrb[0].mxu0
        %v536 = vadd.f32 %v484, %v535
        %v537 = vpop.f32.mrb[0].mxu0
        %v538 = vpop.f32.mrb[0].mxu0
        %v539 = vpop.f32.mrb[0].mxu0
        %540 = vdwg.mxu0
        %s541 = smul.u32 %s34, 8
        %v542 = vlaneseq
        %v543 = vshrl.u32 %v542, 7
        %v544 = vstv %s541
        %v545 = vadd.s32 %v544, %v543
        %v546 = vlaneseq
        %v547 = vand.u32 %v546, 127
        %vm548 = vcmp.le.s32.totalorder %v547, %v545
        %v549 = vpack.c.bf16 %v474, %v474
        %v550 = vpack.c.bf16 %v536, %v536
        %vm551 = vcmask 64512
        %v553 = vsel %vm551, %v549, 0
        %v556 = vsel %vm551, %v550, 0
        %558 = vmatprep.subr.bf16.mxu0 0
        %559 = vmatpush1.bf16.xpose.msra.mxu0 %v556
        %560 = vmatprep.subr.bf16.mxu0 0
        %561 = vmatpush1.bf16.xpose.msra.mxu0 0
        %562 = vmatprep.subr.bf16.mxu0 0
        %563 = vmatpush1.bf16.xpose.msra.mxu0 0
        %564 = vmatprep.subr.bf16.mxu0 0
        %565 = vmatpush1.bf16.xpose.msra.mxu0 0
        %566 = vmatprep.subr.bf16.mxu0 0
        %567 = vmatpush1.bf16.xpose.msra.mxu0 0
        %568 = vmatprep.subr.bf16.mxu0 0
        %569 = vmatpush1.bf16.xpose.msra.mxu0 0
        %570 = vmatprep.subr.bf16.mxu0 0
        %571 = vmatpush1.bf16.xpose.msra.mxu0 0
        %572 = vmatprep.subr.bf16.mxu0 0
        %573 = vmatpush1.bf16.xpose.msra.mxu0 0
        %574 = vmatprep.subr.bf16.mxu0 0
        %575 = vmatpush1.bf16.xpose.msra.mxu0 0
        %576 = vmatprep.subr.bf16.mxu0 0
        %577 = vmatpush1.bf16.xpose.msra.mxu0 0
        %578 = vmatprep.subr.bf16.mxu0 0
        %579 = vmatpush1.bf16.xpose.msra.mxu0 0
        %580 = vmatprep.subr.bf16.mxu0 0
        %581 = vmatpush1.bf16.xpose.msra.mxu0 0
        %582 = vmatprep.subr.bf16.mxu0 0
        %583 = vmatpush1.bf16.xpose.msra.mxu0 0
        %584 = vmatprep.subr.bf16.mxu0 0
        %585 = vmatpush1.bf16.xpose.msra.mxu0 0
        %586 = vmatprep.subr.bf16.mxu0 0
        %587 = vmatpush1.bf16.xpose.msra.mxu0 0
        %588 = vmatprep.subr.bf16.mxu0 0
        %589 = vmatpush1.bf16.xpose.msra.mxu0 0
        %590 = vmatprep.mubr.bf16.mxu0 0
        %591 = vmatmul.mubr.bf16.gmra.mrb[0].mxu0 %v553
        %v592 = vpop.f32.mrb[0].mxu0
        %v593 = vadd.f32 0.0, %v592
        %v594 = vpop.f32.mrb[0].mxu0
        %v595 = vpop.f32.mrb[0].mxu0
        %v596 = vpop.f32.mrb[0].mxu0
        %597 = vdwg.mxu0
        %v598 = vsel %vm548, %v593, -2.3819763e+38
        %v599 = vsel %vm551, %v598, -inf
        %600 = vmax.xlane.f32.xlu0 %v599
        %v601 = vpop.xlane.xlu0 %600
        %v602 = vsub.f32 %v598, %v601
        %v603 = vmul.f32 %v602, 1.442695
        %v604 = vpow.pop %v603
        %v605 = vsel %vm551, %v604, 0.0
        %606 = vadd.xlane.f32.xlu0 %v605
        %v607 = vpop.xlane.xlu0 %606
        %v608 = vrcp.pop %v607
        %v609 = vmul.f32 1.0, %v608
        %v610 = vmul.f32 %v604, %v609
        %v611 = vpack.c.bf16 %v610, %v610
        %613 = vrot.lane.b32.xlu0 %v550, 96
        %v614 = vpop.permute.xlu0 %613
        %v616 = vsel %vm551, %v611, 0
        %vm618 = vcmask 1043456
        %v620 = vsel %vm618, %v614, 0
        %622 = vmatprep.subr.bf16.mxu0 0
        %623 = vmatpush1.bf16.msra.mxu0 %v620
        %624 = vmatprep.subr.bf16.mxu0 0
        %625 = vmatpush1.bf16.msra.mxu0 0
        %626 = vmatprep.subr.bf16.mxu0 0
        %627 = vmatpush1.bf16.msra.mxu0 0
        %628 = vmatprep.subr.bf16.mxu0 0
        %629 = vmatpush1.bf16.msra.mxu0 0
        %630 = vmatprep.subr.bf16.mxu0 0
        %631 = vmatpush1.bf16.msra.mxu0 0
        %632 = vmatprep.subr.bf16.mxu0 0
        %633 = vmatpush1.bf16.msra.mxu0 0
        %634 = vmatprep.subr.bf16.mxu0 0
        %635 = vmatpush1.bf16.msra.mxu0 0
        %636 = vmatprep.subr.bf16.mxu0 0
        %637 = vmatpush1.bf16.msra.mxu0 0
        %638 = vmatprep.subr.bf16.mxu0 0
        %639 = vmatpush1.bf16.msra.mxu0 0
        %640 = vmatprep.subr.bf16.mxu0 0
        %641 = vmatpush1.bf16.msra.mxu0 0
        %642 = vmatprep.subr.bf16.mxu0 0
        %643 = vmatpush1.bf16.msra.mxu0 0
        %644 = vmatprep.subr.bf16.mxu0 0
        %645 = vmatpush1.bf16.msra.mxu0 0
        %646 = vmatprep.subr.bf16.mxu0 0
        %647 = vmatpush1.bf16.msra.mxu0 0
        %648 = vmatprep.subr.bf16.mxu0 0
        %649 = vmatpush1.bf16.msra.mxu0 0
        %650 = vmatprep.subr.bf16.mxu0 0
        %651 = vmatpush1.bf16.msra.mxu0 0
        %652 = vmatprep.subr.bf16.mxu0 0
        %653 = vmatpush1.bf16.msra.mxu0 0
        %654 = vmatprep.mubr.bf16.mxu0 0
        %655 = vmatmul.mubr.bf16.gmra.mrb[0].mxu0 %v616
        %v656 = vpop.f32.mrb[0].mxu0
        %v657 = vadd.f32 0.0, %v656
        %v658 = vpop.f32.mrb[0].mxu0
        %v659 = vpop.f32.mrb[0].mxu0
        %v660 = vpop.f32.mrb[0].mxu0
        %661 = vdwg.mxu0
        %663 = vrot.lane.b32.xlu0 %v549, 120
        %v664 = vpop.permute.xlu0 %663
        %665 = vrot.lane.b32.xlu0 %v550, 120
        %v666 = vpop.permute.xlu0 %665
        %v668 = vsel %vm551, %v664, 0
        %v671 = vsel %vm551, %v666, 0
        %673 = vmatprep.subr.bf16.mxu0 0
        %674 = vmatpush1.bf16.xpose.msra.mxu0 %v671
        %675 = vmatprep.subr.bf16.mxu0 0
        %676 = vmatpush1.bf16.xpose.msra.mxu0 0
        %677 = vmatprep.subr.bf16.mxu0 0
        %678 = vmatpush1.bf16.xpose.msra.mxu0 0
        %679 = vmatprep.subr.bf16.mxu0 0
        %680 = vmatpush1.bf16.xpose.msra.mxu0 0
        %681 = vmatprep.subr.bf16.mxu0 0
        %682 = vmatpush1.bf16.xpose.msra.mxu0 0
        %683 = vmatprep.subr.bf16.mxu0 0
        %684 = vmatpush1.bf16.xpose.msra.mxu0 0
        %685 = vmatprep.subr.bf16.mxu0 0
        %686 = vmatpush1.bf16.xpose.msra.mxu0 0
        %687 = vmatprep.subr.bf16.mxu0 0
        %688 = vmatpush1.bf16.xpose.msra.mxu0 0
        %689 = vmatprep.subr.bf16.mxu0 0
        %690 = vmatpush1.bf16.xpose.msra.mxu0 0
        %691 = vmatprep.subr.bf16.mxu0 0
        %692 = vmatpush1.bf16.xpose.msra.mxu0 0
        %693 = vmatprep.subr.bf16.mxu0 0
        %694 = vmatpush1.bf16.xpose.msra.mxu0 0
        %695 = vmatprep.subr.bf16.mxu0 0
        %696 = vmatpush1.bf16.xpose.msra.mxu0 0
        %697 = vmatprep.subr.bf16.mxu0 0
        %698 = vmatpush1.bf16.xpose.msra.mxu0 0
        %699 = vmatprep.subr.bf16.mxu0 0
        %700 = vmatpush1.bf16.xpose.msra.mxu0 0
        %701 = vmatprep.subr.bf16.mxu0 0
        %702 = vmatpush1.bf16.xpose.msra.mxu0 0
        %703 = vmatprep.subr.bf16.mxu0 0
        %704 = vmatpush1.bf16.xpose.msra.mxu0 0
        %705 = vmatprep.mubr.bf16.mxu0 0
        %706 = vmatmul.mubr.bf16.gmra.mrb[0].mxu0 %v668
        %v707 = vpop.f32.mrb[0].mxu0
        %v708 = vadd.f32 0.0, %v707
        %v709 = vpop.f32.mrb[0].mxu0
        %v710 = vpop.f32.mrb[0].mxu0
        %v711 = vpop.f32.mrb[0].mxu0
        %712 = vdwg.mxu0
        %v713 = vsel %vm548, %v708, -2.3819763e+38
        %v714 = vsel %vm551, %v713, -inf
        %715 = vmax.xlane.f32.xlu0 %v714
        %v716 = vpop.xlane.xlu0 %715
        %v717 = vsub.f32 %v713, %v716
        %v718 = vmul.f32 %v717, 1.442695
        %v719 = vpow.pop %v718
        %v720 = vsel %vm551, %v719, 0.0
        %721 = vadd.xlane.f32.xlu0 %v720
        %v722 = vpop.xlane.xlu0 %721
        %v723 = vrcp.pop %v722
        %v724 = vmul.f32 1.0, %v723
        %v725 = vmul.f32 %v719, %v724
        %v726 = vpack.c.bf16 %v725, %v725
        %727 = vrot.lane.b32.xlu0 %v550, 88
        %v728 = vpop.permute.xlu0 %727
        %v730 = vsel %vm551, %v726, 0
        %v733 = vsel %vm618, %v728, 0
        %735 = vmatprep.subr.bf16.mxu0 0
        %736 = vmatpush1.bf16.msra.mxu0 %v733
        %737 = vmatprep.subr.bf16.mxu0 0
        %738 = vmatpush1.bf16.msra.mxu0 0
        %739 = vmatprep.subr.bf16.mxu0 0
        %740 = vmatpush1.bf16.msra.mxu0 0
        %741 = vmatprep.subr.bf16.mxu0 0
        %742 = vmatpush1.bf16.msra.mxu0 0
        %743 = vmatprep.subr.bf16.mxu0 0
        %744 = vmatpush1.bf16.msra.mxu0 0
        %745 = vmatprep.subr.bf16.mxu0 0
        %746 = vmatpush1.bf16.msra.mxu0 0
        %747 = vmatprep.subr.bf16.mxu0 0
        %748 = vmatpush1.bf16.msra.mxu0 0
        %749 = vmatprep.subr.bf16.mxu0 0
        %750 = vmatpush1.bf16.msra.mxu0 0
        %751 = vmatprep.subr.bf16.mxu0 0
        %752 = vmatpush1.bf16.msra.mxu0 0
        %753 = vmatprep.subr.bf16.mxu0 0
        %754 = vmatpush1.bf16.msra.mxu0 0
        %755 = vmatprep.subr.bf16.mxu0 0
        %756 = vmatpush1.bf16.msra.mxu0 0
        %757 = vmatprep.subr.bf16.mxu0 0
        %758 = vmatpush1.bf16.msra.mxu0 0
        %759 = vmatprep.subr.bf16.mxu0 0
        %760 = vmatpush1.bf16.msra.mxu0 0
        %761 = vmatprep.subr.bf16.mxu0 0
        %762 = vmatpush1.bf16.msra.mxu0 0
        %763 = vmatprep.subr.bf16.mxu0 0
        %764 = vmatpush1.bf16.msra.mxu0 0
        %765 = vmatprep.subr.bf16.mxu0 0
        %766 = vmatpush1.bf16.msra.mxu0 0
        %767 = vmatprep.mubr.bf16.mxu0 0
        %768 = vmatmul.mubr.bf16.gmra.mrb[0].mxu0 %v730
        %v769 = vpop.f32.mrb[0].mxu0
        %v770 = vadd.f32 0.0, %v769
        %v771 = vpop.f32.mrb[0].mxu0
        %v772 = vpop.f32.mrb[0].mxu0
        %v773 = vpop.f32.mrb[0].mxu0
        %774 = vdwg.mxu0
        %775 = vrot.lane.b32.xlu0 %v549, 112
        %v776 = vpop.permute.xlu0 %775
        %777 = vrot.lane.b32.xlu0 %v550, 112
        %v778 = vpop.permute.xlu0 %777
        %v780 = vsel %vm551, %v776, 0
        %v783 = vsel %vm551, %v778, 0
        %785 = vmatprep.subr.bf16.mxu0 0
        %786 = vmatpush1.bf16.xpose.msra.mxu0 %v783
        %787 = vmatprep.subr.bf16.mxu0 0
        %788 = vmatpush1.bf16.xpose.msra.mxu0 0
        %789 = vmatprep.subr.bf16.mxu0 0
        %790 = vmatpush1.bf16.xpose.msra.mxu0 0
        %791 = vmatprep.subr.bf16.mxu0 0
        %792 = vmatpush1.bf16.xpose.msra.mxu0 0
        %793 = vmatprep.subr.bf16.mxu0 0
        %794 = vmatpush1.bf16.xpose.msra.mxu0 0
        %795 = vmatprep.subr.bf16.mxu0 0
        %796 = vmatpush1.bf16.xpose.msra.mxu0 0
        %797 = vmatprep.subr.bf16.mxu0 0
        %798 = vmatpush1.bf16.xpose.msra.mxu0 0
        %799 = vmatprep.subr.bf16.mxu0 0
        %800 = vmatpush1.bf16.xpose.msra.mxu0 0
        %801 = vmatprep.subr.bf16.mxu0 0
        %802 = vmatpush1.bf16.xpose.msra.mxu0 0
        %803 = vmatprep.subr.bf16.mxu0 0
        %804 = vmatpush1.bf16.xpose.msra.mxu0 0
        %805 = vmatprep.subr.bf16.mxu0 0
        %806 = vmatpush1.bf16.xpose.msra.mxu0 0
        %807 = vmatprep.subr.bf16.mxu0 0
        %808 = vmatpush1.bf16.xpose.msra.mxu0 0
        %809 = vmatprep.subr.bf16.mxu0 0
        %810 = vmatpush1.bf16.xpose.msra.mxu0 0
        %811 = vmatprep.subr.bf16.mxu0 0
        %812 = vmatpush1.bf16.xpose.msra.mxu0 0
        %813 = vmatprep.subr.bf16.mxu0 0
        %814 = vmatpush1.bf16.xpose.msra.mxu0 0
        %815 = vmatprep.subr.bf16.mxu0 0
        %816 = vmatpush1.bf16.xpose.msra.mxu0 0
        %817 = vmatprep.mubr.bf16.mxu0 0
        %818 = vmatmul.mubr.bf16.gmra.mrb[0].mxu0 %v780
        %v819 = vpop.f32.mrb[0].mxu0
        %v820 = vadd.f32 0.0, %v819
        %v821 = vpop.f32.mrb[0].mxu0
        %v822 = vpop.f32.mrb[0].mxu0
        %v823 = vpop.f32.mrb[0].mxu0
        %824 = vdwg.mxu0
        %v825 = vsel %vm548, %v820, -2.3819763e+38
        %v826 = vsel %vm551, %v825, -inf
        %827 = vmax.xlane.f32.xlu0 %v826
        %v828 = vpop.xlane.xlu0 %827
        %v829 = vsub.f32 %v825, %v828
        %v830 = vmul.f32 %v829, 1.442695
        %v831 = vpow.pop %v830
        %v832 = vsel %vm551, %v831, 0.0
        %833 = vadd.xlane.f32.xlu0 %v832
        %v834 = vpop.xlane.xlu0 %833
        %v835 = vrcp.pop %v834
        %v836 = vmul.f32 1.0, %v835
        %v837 = vmul.f32 %v831, %v836
        %v838 = vpack.c.bf16 %v837, %v837
        %839 = vrot.lane.b32.xlu0 %v550, 80
        %v840 = vpop.permute.xlu0 %839
        %v842 = vsel %vm551, %v838, 0
        %v845 = vsel %vm618, %v840, 0
        %847 = vmatprep.subr.bf16.mxu0 0
        %848 = vmatpush1.bf16.msra.mxu0 %v845
        %849 = vmatprep.subr.bf16.mxu0 0
        %850 = vmatpush1.bf16.msra.mxu0 0
        %851 = vmatprep.subr.bf16.mxu0 0
        %852 = vmatpush1.bf16.msra.mxu0 0
        %853 = vmatprep.subr.bf16.mxu0 0
        %854 = vmatpush1.bf16.msra.mxu0 0
        %855 = vmatprep.subr.bf16.mxu0 0
        %856 = vmatpush1.bf16.msra.mxu0 0
        %857 = vmatprep.subr.bf16.mxu0 0
        %858 = vmatpush1.bf16.msra.mxu0 0
        %859 = vmatprep.subr.bf16.mxu0 0
        %860 = vmatpush1.bf16.msra.mxu0 0
        %861 = vmatprep.subr.bf16.mxu0 0
        %862 = vmatpush1.bf16.msra.mxu0 0
        %863 = vmatprep.subr.bf16.mxu0 0
        %864 = vmatpush1.bf16.msra.mxu0 0
        %865 = vmatprep.subr.bf16.mxu0 0
        %866 = vmatpush1.bf16.msra.mxu0 0
        %867 = vmatprep.subr.bf16.mxu0 0
        %868 = vmatpush1.bf16.msra.mxu0 0
        %869 = vmatprep.subr.bf16.mxu0 0
        %870 = vmatpush1.bf16.msra.mxu0 0
        %871 = vmatprep.subr.bf16.mxu0 0
        %872 = vmatpush1.bf16.msra.mxu0 0
        %873 = vmatprep.subr.bf16.mxu0 0
        %874 = vmatpush1.bf16.msra.mxu0 0
        %875 = vmatprep.subr.bf16.mxu0 0
        %876 = vmatpush1.bf16.msra.mxu0 0
        %877 = vmatprep.subr.bf16.mxu0 0
        %878 = vmatpush1.bf16.msra.mxu0 0
        %879 = vmatprep.mubr.bf16.mxu0 0
        %880 = vmatmul.mubr.bf16.gmra.mrb[0].mxu0 %v842
        %v881 = vpop.f32.mrb[0].mxu0
        %v882 = vadd.f32 0.0, %v881
        %v883 = vpop.f32.mrb[0].mxu0
        %v884 = vpop.f32.mrb[0].mxu0
        %v885 = vpop.f32.mrb[0].mxu0
        %886 = vdwg.mxu0
        %887 = vrot.lane.b32.xlu0 %v549, 104
        %v888 = vpop.permute.xlu0 %887
        %889 = vrot.lane.b32.xlu0 %v550, 104
        %v890 = vpop.permute.xlu0 %889
        %v892 = vsel %vm551, %v888, 0
        %v895 = vsel %vm551, %v890, 0
        %897 = vmatprep.subr.bf16.mxu0 0
        %898 = vmatpush1.bf16.xpose.msra.mxu0 %v895
        %899 = vmatprep.subr.bf16.mxu0 0
        %900 = vmatpush1.bf16.xpose.msra.mxu0 0
        %901 = vmatprep.subr.bf16.mxu0 0
        %902 = vmatpush1.bf16.xpose.msra.mxu0 0
        %903 = vmatprep.subr.bf16.mxu0 0
        %904 = vmatpush1.bf16.xpose.msra.mxu0 0
        %905 = vmatprep.subr.bf16.mxu0 0
        %906 = vmatpush1.bf16.xpose.msra.mxu0 0
        %907 = vmatprep.subr.bf16.mxu0 0
        %908 = vmatpush1.bf16.xpose.msra.mxu0 0
        %909 = vmatprep.subr.bf16.mxu0 0
        %910 = vmatpush1.bf16.xpose.msra.mxu0 0
        %911 = vmatprep.subr.bf16.mxu0 0
        %912 = vmatpush1.bf16.xpose.msra.mxu0 0
        %913 = vmatprep.subr.bf16.mxu0 0
        %914 = vmatpush1.bf16.xpose.msra.mxu0 0
        %915 = vmatprep.subr.bf16.mxu0 0
        %916 = vmatpush1.bf16.xpose.msra.mxu0 0
        %917 = vmatprep.subr.bf16.mxu0 0
        %918 = vmatpush1.bf16.xpose.msra.mxu0 0
        %919 = vmatprep.subr.bf16.mxu0 0
        %920 = vmatpush1.bf16.xpose.msra.mxu0 0
        %921 = vmatprep.subr.bf16.mxu0 0
        %922 = vmatpush1.bf16.xpose.msra.mxu0 0
        %923 = vmatprep.subr.bf16.mxu0 0
        %924 = vmatpush1.bf16.xpose.msra.mxu0 0
        %925 = vmatprep.subr.bf16.mxu0 0
        %926 = vmatpush1.bf16.xpose.msra.mxu0 0
        %927 = vmatprep.subr.bf16.mxu0 0
        %928 = vmatpush1.bf16.xpose.msra.mxu0 0
        %929 = vmatprep.mubr.bf16.mxu0 0
        %930 = vmatmul.mubr.bf16.gmra.mrb[0].mxu0 %v892
        %v931 = vpop.f32.mrb[0].mxu0
        %v932 = vadd.f32 0.0, %v931
        %v933 = vpop.f32.mrb[0].mxu0
        %v934 = vpop.f32.mrb[0].mxu0
        %v935 = vpop.f32.mrb[0].mxu0
        %936 = vdwg.mxu0
        %v937 = vsel %vm548, %v932, -2.3819763e+38
        %v938 = vsel %vm551, %v937, -inf
        %939 = vmax.xlane.f32.xlu0 %v938
        %v940 = vpop.xlane.xlu0 %939
        %v941 = vsub.f32 %v937, %v940
        %v942 = vmul.f32 %v941, 1.442695
        %v943 = vpow.pop %v942
        %v944 = vsel %vm551, %v943, 0.0
        %945 = vadd.xlane.f32.xlu0 %v944
        %v946 = vpop.xlane.xlu0 %945
        %v947 = vrcp.pop %v946
        %v948 = vmul.f32 1.0, %v947
        %v949 = vmul.f32 %v943, %v948
        %v950 = vpack.c.bf16 %v949, %v949
        %951 = vrot.lane.b32.xlu0 %v550, 72
        %v952 = vpop.permute.xlu0 %951
        %v954 = vsel %vm551, %v950, 0
        %v957 = vsel %vm618, %v952, 0
        %959 = vmatprep.subr.bf16.mxu0 0
        %960 = vmatpush1.bf16.msra.mxu0 %v957
        %961 = vmatprep.subr.bf16.mxu0 0
        %962 = vmatpush1.bf16.msra.mxu0 0
        %963 = vmatprep.subr.bf16.mxu0 0
        %964 = vmatpush1.bf16.msra.mxu0 0
        %965 = vmatprep.subr.bf16.mxu0 0
        %966 = vmatpush1.bf16.msra.mxu0 0
        %967 = vmatprep.subr.bf16.mxu0 0
        %968 = vmatpush1.bf16.msra.mxu0 0
        %969 = vmatprep.subr.bf16.mxu0 0
        %970 = vmatpush1.bf16.msra.mxu0 0
        %971 = vmatprep.subr.bf16.mxu0 0
        %972 = vmatpush1.bf16.msra.mxu0 0
        %973 = vmatprep.subr.bf16.mxu0 0
        %974 = vmatpush1.bf16.msra.mxu0 0
        %975 = vmatprep.subr.bf16.mxu0 0
        %976 = vmatpush1.bf16.msra.mxu0 0
        %977 = vmatprep.subr.bf16.mxu0 0
        %978 = vmatpush1.bf16.msra.mxu0 0
        %979 = vmatprep.subr.bf16.mxu0 0
        %980 = vmatpush1.bf16.msra.mxu0 0
        %981 = vmatprep.subr.bf16.mxu0 0
        %982 = vmatpush1.bf16.msra.mxu0 0
        %983 = vmatprep.subr.bf16.mxu0 0
        %984 = vmatpush1.bf16.msra.mxu0 0
        %985 = vmatprep.subr.bf16.mxu0 0
        %986 = vmatpush1.bf16.msra.mxu0 0
        %987 = vmatprep.subr.bf16.mxu0 0
        %988 = vmatpush1.bf16.msra.mxu0 0
        %989 = vmatprep.subr.bf16.mxu0 0
        %990 = vmatpush1.bf16.msra.mxu0 0
        %991 = vmatprep.mubr.bf16.mxu0 0
        %992 = vmatmul.mubr.bf16.gmra.mrb[0].mxu0 %v954
        %v993 = vpop.f32.mrb[0].mxu0
        %v994 = vadd.f32 0.0, %v993
        %v995 = vpop.f32.mrb[0].mxu0
        %v996 = vpop.f32.mrb[0].mxu0
        %v997 = vpop.f32.mrb[0].mxu0
        %998 = vdwg.mxu0
        %1000 = vrot.lane.b32.xlu0 %v770, 8
        %v1001 = vpop.permute.xlu0 %1000
        %1004 = vrot.lane.b32.xlu0 %v882, 16
        %v1005 = vpop.permute.xlu0 %1004
        %1008 = vrot.lane.b32.xlu0 %v994, 24
        %v1009 = vpop.permute.xlu0 %1008
        %v1011 = vsel %vm551, %v657, %v1001
        %vm1012 = vcmask 130048
        %v1013 = vsel %vm1012, %v1011, %v1005
        %vm1014 = vcmask 195584
        %v1015 = vsel %vm1014, %v1013, %v1009
        %v1016 = vpack.c.bf16 %v1015, %v1015
        %v1017 = vld [vmem:[%s6] sm:$0xf]
        %v1018 = vld [vmem:[%s6 + $0x4] sm:$0xf]
        %v1019 = vld [vmem:[%s6 + $0x8] sm:$0xf]
        %v1020 = vld [vmem:[%s6 + $0xc] sm:$0xf]
        %v1021 = vld [vmem:[%s7] sm:$0x1]
        %v1023 = vlaneseq
        %v1024 = vshrl.u32 %v1023, 7
        %v1025 = vsub.s32 0, %v1024
        %v1026 = vrot.slane %v1021, %v1025
        %v1032 = vunpack.c.l.b16 %v1017
        %v1033 = vunpack.c.l.b16 %v1018
        %v1034 = vunpack.c.l.b16 %v1019
        %v1035 = vunpack.c.l.b16 %v1020
        %v1036 = vpack.c.b16 %v1033, %v1032
        %v1037 = vpack.c.b16 %v1035, %v1034
        %v1041 = vsel %vm430, %v1016, 0
        %1043 = vmatprep.subr.bf16.mxu0 0
        %1044 = vmatpush1.bf16.msra.mxu0 %v1036
        %1045 = vmatprep.subr.bf16.mxu0 0
        %1046 = vmatpush1.bf16.msra.mxu0 %v1037
        %1047 = vmatprep.subr.bf16.mxu0 0
        %1048 = vmatpush1.bf16.msra.mxu0 0
        %1049 = vmatprep.subr.bf16.mxu0 0
        %1050 = vmatpush1.bf16.msra.mxu0 0
        %1051 = vmatprep.subr.bf16.mxu0 0
        %1052 = vmatpush1.bf16.msra.mxu0 0
        %1053 = vmatprep.subr.bf16.mxu0 0
        %1054 = vmatpush1.bf16.msra.mxu0 0
        %1055 = vmatprep.subr.bf16.mxu0 0
        %1056 = vmatpush1.bf16.msra.mxu0 0
        %1057 = vmatprep.subr.bf16.mxu0 0
        %1058 = vmatpush1.bf16.msra.mxu0 0
        %1059 = vmatprep.subr.bf16.mxu0 0
        %1060 = vmatpush1.bf16.msra.mxu0 0
        %1061 = vmatprep.subr.bf16.mxu0 0
        %1062 = vmatpush1.bf16.msra.mxu0 0
        %1063 = vmatprep.subr.bf16.mxu0 0
        %1064 = vmatpush1.bf16.msra.mxu0 0
        %1065 = vmatprep.subr.bf16.mxu0 0
        %1066 = vmatpush1.bf16.msra.mxu0 0
        %1067 = vmatprep.subr.bf16.mxu0 0
        %1068 = vmatpush1.bf16.msra.mxu0 0
        %1069 = vmatprep.subr.bf16.mxu0 0
        %1070 = vmatpush1.bf16.msra.mxu0 0
        %1071 = vmatprep.subr.bf16.mxu0 0
        %1072 = vmatpush1.bf16.msra.mxu0 0
        %1073 = vmatprep.subr.bf16.mxu0 0
        %1074 = vmatpush1.bf16.msra.mxu0 0
        %1075 = vmatprep.mubr.bf16.mxu0 0
        %1076 = vmatmul.mubr.bf16.gmra.mrb[0].mxu0 %v1041
        %v1077 = vpop.f32.mrb[0].mxu0
        %v1078 = vadd.f32 %v1026, %v1077
        %v1079 = vpop.f32.mrb[0].mxu0
        %v1080 = vpop.f32.mrb[0].mxu0
        %v1081 = vpop.f32.mrb[0].mxu0
        %1082 = vdwg.mxu0
        %1083 = vst.msk [vmem:[%s403] sm:$0xff] %vm430, %v1078
        %s1084 = sand.u32 %s231, 1
        %s1085 = scalar_lea.sflag [#allocation4], %s1084
        %s1086 = sand.u32 %s231, 1
        %s1087 = smul.addr %s1086, 8
        %s1088 = scalar_lea.vmem [#allocation10], %s1087
        // Predicated region
        $region69: #{tpu_custom_call.1} parent=51 // pred_check
          %p1089 = pneg %p241
        $region70: #{tpu_custom_call.1} parent=51 // pred_check_branch
          %1091 = sbr.rel (%p1089) target = $region72
        $region71: #{tpu_custom_call.1} parent=51 // pred_region
          %s1093 = ssub.s32 128, 128
          %1094 = vsyncadd %s1085, %s1093
          %s1095 = sadd.s32 %s34, %s33
          %s1096 = smul.addr %s1095, 128
          %s1097 = scalar_lea.hbm %s8, %s1096
          %s1099 = sshll.u32 %s1088, 4
          %s1100 = int_to_ptr.vmem [resolvable:$true] %s1099
          %1102 = dma.vmem_to_hbm [thread:$0]  %s1100, 128, %s1097, %s1085
        $region72: #{tpu_custom_call.1} parent=51 // pred_fallthru
          _
      $region52: #{tpu_custom_call.1} parent=5 // pred_fallthru
        _
      %p1103 = scmp.le.s32.totalorder 2, %s24
      // Predicated region
      $region73: #{tpu_custom_call.1} parent=5 // pred_check
        %p1104 = pneg %p1103
      $region74: #{tpu_custom_call.1} parent=5 // pred_check_branch
        %1106 = sbr.rel (%p1104) target = $region76
      $region75: #{tpu_custom_call.1} parent=5 // pred_region
        %s1107 = ssub.s32 %s24, 2
        // Predicated region
        $region77: #{tpu_custom_call.1} parent=75 // pred_check
          %p1108 = pneg %p247
        $region78: #{tpu_custom_call.1} parent=75 // pred_check_branch
          %1110 = sbr.rel (%p1108) target = $region80
        $region79: #{tpu_custom_call.1} parent=75 // pred_region
          %s1111 = sand.u32 %s232, 1
          %s1112 = scalar_lea.sflag [#allocation4], %s1111
          %s1113 = sand.u32 %s232, 1
          %s1114 = smul.addr %s1113, 8
          %s1115 = scalar_lea.vmem [#allocation10], %s1114
          %1116 = dma.done %s1112, 128
        $region80: #{tpu_custom_call.1} parent=75 // pred_fallthru
          _
      $region76: #{tpu_custom_call.1} parent=5 // pred_fallthru
        _
    $region6: #{tpu_custom_call.1} parent=1 // loop_footer
      %s28 = sadd.s32 1, %s24
    $region7: #{tpu_custom_call.1} parent=1 // loop_footer_branch
      %23 = sbr.rel target = $region3
    $region8: #{tpu_custom_call.1} parent=1 // loop_exit
      _
    %1117 = vsyncpa [#allocation3], 1
    %s1118 = scalar_lea.sflag [#allocation3], 1
    %1119 = vsyncpa %s1118, 1
    %1120 = vsyncpa [#allocation6], 1
    %s1121 = scalar_lea.sflag [#allocation6], 1
    %1122 = vsyncpa %s1121, 1
    %1123 = vsyncpa [#allocation9], 1
    %1124 = vsyncpa [#allocation4], 1
    %s1125 = scalar_lea.sflag [#allocation4], 1
    %1126 = vsyncpa %s1125, 1

</llo_original>
